<compile_context>
chip_gen: v6e
topology: v6e:2x2x1
jax: 0.10.0
libtpu: 0.0.40
codegen_flags: <defaults>
</compile_context>

<pallas_src>
import math
import functools

import jax
import jax.numpy as jnp
from jax import lax
from jax.experimental import pallas as pl
from jax.experimental.pallas import tpu as pltpu


def _round_up(x: int, m: int) -> int:
    return (x + m - 1) // m * m


def _sublane_multiple(dtype) -> int:
    # 8 rows for 4-byte dtypes, 16 for bf16/f16, 32 for int8/fp8 (sublane packing).
    return max(8, 32 // jnp.dtype(dtype).itemsize)


def _pick_tile(total_blocks: int, cap_blocks: int, want_multi: bool = False) -> int:
    """Largest divisor (in 128-lane blocks) of total_blocks that is <= cap_blocks.

    Guarantees the tile divides the 128-rounded dimension exactly, so no
    zero-padded tiles are ever streamed from HBM.  With want_multi=True,
    prefer choices that leave >= 2 tiles (feeds both v7x TensorCores).
    """
    cap_blocks = max(1, cap_blocks)
    divisors = [d for d in range(1, total_blocks + 1) if total_blocks % d == 0]
    cands = [d for d in divisors if d <= cap_blocks] or [1]
    if want_multi and total_blocks >= 2:
        multi = [d for d in cands if total_blocks // d >= 2]
        if multi:
            cands = multi
    return max(cands) * 128


def noisy_linear_kernel(x_ref, wmu_ref, wsig_ref, eps_in_ref, eps_out_ref,
                        beff_ref, o_ref, acc_mu, acc_sig):
    k = pl.program_id(2)

    @pl.when(k == 0)
    def _init():
        acc_mu[...] = jnp.zeros_like(acc_mu)
        acc_sig[...] = jnp.zeros_like(acc_sig)

    # Contract in_features of x (axis 1) with in_features of W (axis 1):
    # the (out, in) weight tile feeds the MXU with no wrapper transpose.
    dn = (((1,), (1,)), ((), ()))
    x = x_ref[...]                                          # (bm, tk)
    acc_mu[...] += lax.dot_general(
        x, wmu_ref[...], dimension_numbers=dn,
        preferred_element_type=jnp.float32)
    # Factorized noise: x @ (W_sigma * outer(eps_out, eps_in))^T
    #                 == ((x * eps_in) @ W_sigma^T) * eps_out
    acc_sig[...] += lax.dot_general(
        x * eps_in_ref[...], wsig_ref[...], dimension_numbers=dn,
        preferred_element_type=jnp.float32)

    @pl.when(k == pl.num_programs(2) - 1)
    def _finalize():
        o_ref[...] = (acc_mu[...] + acc_sig[...] * eps_out_ref[...]
                      + beff_ref[...]).astype(o_ref.dtype)


@functools.partial(jax.jit, static_argnames=("tn_cap", "tk_cap", "bm_cap"))
def noisy_linear(x, weight_mu, weight_sigma, bias_mu, bias_sigma,
                 eps_in, eps_out, *, tn_cap=256, tk_cap=4096, bm_cap=256):
    """Noisy linear forward.  x: (B, in); weights: (out, in) PyTorch layout.

    Weights stream from HBM at their STORED dtype (store them in bf16 to halve
    weight traffic); accumulation is always f32.
    """
    batch, in_features = x.shape
    out_features = weight_mu.shape[0]

    # Pad K/N only to 128 (lane granularity); tiles are exact divisors of the
    # padded dims, so no zero tiles are streamed.
    Kp = _round_up(in_features, 128)
    Np = _round_up(out_features, 128)
    tk = _pick_tile(Kp // 128, tk_cap // 128)
    tn = _pick_tile(Np // 128, tn_cap // 128, want_multi=True)

    # Batch: round to sublane packing of x's dtype; large batches get their own
    # leading parallel grid axis (avoids re-streaming x per out-tile and keeps
    # the f32 accumulators small).
    sub = _sublane_multiple(x.dtype)
    bm_cap = _round_up(bm_cap, sub)
    Bp = _round_up(batch, sub)
    if Bp <= bm_cap:
        bm = Bp
    else:
        bm = bm_cap
        Bp = _round_up(Bp, bm)

    def pad2(a, rows, cols):
        r, c = a.shape
        return jnp.pad(a, ((0, rows - r), (0, cols - c)))

    xp   = pad2(x, Bp, Kp)
    wmu  = pad2(weight_mu, Np, Kp)            # stored dtype, no cast
    wsig = pad2(weight_sigma, Np, Kp)         # stored dtype, no cast
    # eps_in multiplies x in-kernel: keep it in x's dtype (tiny O(in) cast).
    ein  = pad2(eps_in.reshape(1, -1).astype(x.dtype), 1, Kp)
    # Tiny O(out) vectors: fold the bias here and keep f32 for the finalize.
    eout32 = eps_out.astype(jnp.float32)
    beff32 = bias_mu.astype(jnp.float32) + bias_sigma.astype(jnp.float32) * eout32
    eoutp = pad2(eout32.reshape(1, -1), 1, Np)
    beffp = pad2(beff32.reshape(1, -1), 1, Np)

    grid = (Bp // bm, Np // tn, Kp // tk)     # reduction axis last

    # Live-VMEM estimate (double-buffered streams + f32 accumulators).
    wbytes = jnp.dtype(weight_mu.dtype).itemsize
    xbytes = jnp.dtype(x.dtype).itemsize
    vmem_est = (2 * 2 * tn * tk * wbytes      # W_mu + W_sigma streams
                + 2 * bm * tk * xbytes        # x stream
                + 2 * bm * tn * xbytes        # output stream
                + 2 * bm * tn * 4             # f32 accumulators
                + 2 * 8 * tk * xbytes         # eps_in row
                + 2 * 2 * 8 * tn * 4)         # eps_out + b_eff rows
    # Cap below v7x's 64 MiB/TC physical VMEM; v5e/v6e still need the explicit
    # limit because their scoped default is only 16/32 MiB.
    vmem_limit = min(max(int(1.5 * vmem_est), 32 * 1024 * 1024),
                     48 * 1024 * 1024)

    out = pl.pallas_call(
        noisy_linear_kernel,
        out_shape=jax.ShapeDtypeStruct((Bp, Np), x.dtype),
        grid_spec=pltpu.PrefetchScalarGridSpec(
            num_scalar_prefetch=0,
            grid=grid,
            in_specs=[
                pl.BlockSpec((bm, tk), lambda b, n, k: (b, k)),   # x
                pl.BlockSpec((tn, tk), lambda b, n, k: (n, k)),   # W_mu
                pl.BlockSpec((tn, tk), lambda b, n, k: (n, k)),   # W_sigma
                pl.BlockSpec((1, tk),  lambda b, n, k: (0, k)),   # eps_in
                pl.BlockSpec((1, tn),  lambda b, n, k: (0, n)),   # eps_out
                pl.BlockSpec((1, tn),  lambda b, n, k: (0, n)),   # b_eff
            ],
            out_specs=pl.BlockSpec((bm, tn), lambda b, n, k: (b, n)),
            scratch_shapes=[pltpu.VMEM((bm, tn), jnp.float32),
                            pltpu.VMEM((bm, tn), jnp.float32)]),
        compiler_params=pltpu.CompilerParams(
            dimension_semantics=("parallel", "parallel", "arbitrary"),
            vmem_limit_bytes=vmem_limit),
    )(xp, wmu, wsig, ein, eoutp, beffp)

    return out[:batch, :out_features]


def scale_noise(key, size):
    # f(x) = sign(x) * sqrt(|x|) on a standard normal sample (as in the module)
    x = jax.random.normal(key, (size,), dtype=jnp.float32)
    return jnp.sign(x) * jnp.sqrt(jnp.abs(x))


if __name__ == "__main__":
    # Small shapes, sized to exercise a real multi-tile grid with the
    # accumulate/finalize path and the divisor-based tile picking (384 = 3*128).
    batch, in_features, out_features = 8, 256, 384
    std_init = 0.5

    key = jax.random.PRNGKey(0)
    k_wmu, k_bmu, k_ein, k_eout, k_x = jax.random.split(key, 5)

    mu_range = 1.0 / math.sqrt(in_features)
    weight_mu = jax.random.uniform(
        k_wmu, (out_features, in_features), jnp.float32,
        minval=-mu_range, maxval=mu_range)
    weight_sigma = jnp.full((out_features, in_features),
                            std_init / math.sqrt(out_features), jnp.float32)
    bias_mu = jax.random.uniform(
        k_bmu, (out_features,), jnp.float32, minval=-mu_range, maxval=mu_range)
    bias_sigma = jnp.full((out_features,),
                          std_init / math.sqrt(out_features), jnp.float32)

    # Factorized noise (buffers in the PyTorch module).
    eps_in = scale_noise(k_ein, in_features)
    eps_out = scale_noise(k_eout, out_features)

    x = jax.random.normal(k_x, (batch, in_features), dtype=jnp.float32)

    # Reference (exact module semantics with the dense epsilon buffer).
    weight_epsilon = jnp.outer(eps_out, eps_in)
    w_eff = weight_mu + weight_sigma * weight_epsilon
    b_eff = bias_mu + bias_sigma * eps_out
    ref = x @ w_eff.T + b_eff

    # --- f32-parameter path (small tiles to force a (1, 3, 2) grid) ---
    out = noisy_linear(x, weight_mu, weight_sigma, bias_mu, bias_sigma,
                       eps_in, eps_out, tn_cap=128, tk_cap=128)
    out = jax.block_until_ready(out)
    assert out.shape == ref.shape
    # Default MXU precision rounds f32 operands; kernel and reference take
    # mathematically-equivalent but differently-rounded paths.
    assert jnp.allclose(out, ref, atol=1e-2, rtol=1e-2), (
        "f32 mismatch vs reference, max abs diff = "
        f"{float(jnp.max(jnp.abs(out - ref)))}")

    # --- bf16 weight-streaming path: caller stores params/activations in bf16
    # (the wrapper does NOT cast the big arrays); halves weight HBM traffic. ---
    bf = lambda a: a.astype(jnp.bfloat16)
    out_bf = noisy_linear(bf(x), bf(weight_mu), bf(weight_sigma),
                          bf(bias_mu), bf(bias_sigma), bf(eps_in), bf(eps_out))
    out_bf = jax.block_until_ready(out_bf)
    f32 = lambda a: a.astype(jnp.float32)
    w_eff_bf = f32(bf(weight_mu)) + f32(bf(weight_sigma)) * jnp.outer(
        f32(bf(eps_out)), f32(bf(eps_in)))
    ref_bf = f32(bf(x)) @ w_eff_bf.T + (f32(bf(bias_mu))
                                        + f32(bf(bias_sigma)) * f32(bf(eps_out)))
    assert out_bf.shape == ref_bf.shape
    assert jnp.allclose(f32(out_bf), ref_bf, atol=7e-2, rtol=7e-2), (
        "bf16 mismatch vs reference, max abs diff = "
        f"{float(jnp.max(jnp.abs(f32(out_bf) - ref_bf)))}")

    print("KERNEL_OK")
</pallas_src>

<mosaic_0001>
module attributes {stable_mosaic.version = 11 : i64} {
  func.func @noisy_linear_kernel(%arg0: i32, %arg1: i32, %arg2: i32, %arg3: memref<8x128xf32, #tpu.memory_space<vmem>>, %arg4: memref<128x128xf32, #tpu.memory_space<vmem>>, %arg5: memref<128x128xf32, #tpu.memory_space<vmem>>, %arg6: memref<1x128xf32, #tpu.memory_space<vmem>>, %arg7: memref<1x128xf32, #tpu.memory_space<vmem>>, %arg8: memref<1x128xf32, #tpu.memory_space<vmem>>, %arg9: memref<8x128xf32, #tpu.memory_space<vmem>>, %arg10: memref<8x128xf32, #tpu.memory_space<vmem>>, %arg11: memref<8x128xf32, #tpu.memory_space<vmem>>) attributes {dimension_semantics = [#tpu.dimension_semantics<parallel>, #tpu.dimension_semantics<parallel>, #tpu.dimension_semantics<arbitrary>], iteration_bounds = array<i64: 1, 3, 2>, scalar_prefetch = 0 : i64, scratch_operands = 2 : i64, tpu.core_type = #tpu.core_type<tc>, window_params = [{transform_indices = @transform_0, window_bounds = array<i64: 8, 128>}, {transform_indices = @transform_1, window_bounds = array<i64: 128, 128>}, {transform_indices = @transform_2, window_bounds = array<i64: 128, 128>}, {transform_indices = @transform_3, window_bounds = array<i64: 1, 128>}, {transform_indices = @transform_4, window_bounds = array<i64: 1, 128>}, {transform_indices = @transform_5, window_bounds = array<i64: 1, 128>}, {transform_indices = @transform_6, window_bounds = array<i64: 8, 128>}]} {
    %c0_i32 = arith.constant 0 : i32
    %0 = arith.cmpi eq, %arg2, %c0_i32 : i32
    %1 = arith.extui %0 : i1 to i32
    %c0_i32_0 = arith.constant 0 : i32
    %2 = arith.cmpi ne, %1, %c0_i32_0 : i32
    scf.if %2 {
      %cst_18 = arith.constant 0.000000e+00 : f32
      %20 = vector.broadcast %cst_18 : f32 to vector<8x128xf32>
      %c0_19 = arith.constant 0 : index
      %c0_20 = arith.constant 0 : index
      %21 = vector.load %arg10[%c0_19, %c0_20] : memref<8x128xf32, #tpu.memory_space<vmem>>, vector<8x128xf32>
      tpu.vector_store %arg10[%c0_19, %c0_20], %20 {strides = array<i32>} : memref<8x128xf32, #tpu.memory_space<vmem>>, vector<8x128xf32>,
      %cst_21 = arith.constant 0.000000e+00 : f32
      %22 = vector.broadcast %cst_21 : f32 to vector<8x128xf32>
      %c0_22 = arith.constant 0 : index
      %c0_23 = arith.constant 0 : index
      %23 = vector.load %arg11[%c0_22, %c0_23] : memref<8x128xf32, #tpu.memory_space<vmem>>, vector<8x128xf32>
      tpu.vector_store %arg11[%c0_22, %c0_23], %22 {strides = array<i32>} : memref<8x128xf32, #tpu.memory_space<vmem>>, vector<8x128xf32>,
    } else {
    }
    %c0 = arith.constant 0 : index
    %c0_1 = arith.constant 0 : index
    %3 = vector.load %arg3[%c0, %c0_1] : memref<8x128xf32, #tpu.memory_space<vmem>>, vector<8x128xf32>
    %c0_2 = arith.constant 0 : index
    %c0_3 = arith.constant 0 : index
    %4 = vector.load %arg10[%c0_2, %c0_3] : memref<8x128xf32, #tpu.memory_space<vmem>>, vector<8x128xf32>
    %c0_4 = arith.constant 0 : index
    %c0_5 = arith.constant 0 : index
    %5 = vector.load %arg4[%c0_4, %c0_5] : memref<128x128xf32, #tpu.memory_space<vmem>>, vector<128x128xf32>
    %cst = arith.constant dense<0.000000e+00> : vector<8x128xf32>
    %6 = tpu.matmul %3, %5, %cst {dimension_numbers = #tpu.dot_dimension_numbers<[1], [1], [0], [0], [0, 0, 1, 0], [], []>} : vector<8x128xf32>, vector<128x128xf32>, vector<8x128xf32> -> vector<8x128xf32>
    %7 = arith.addf %4, %6 : vector<8x128xf32>
    %c0_6 = arith.constant 0 : index
    %c0_7 = arith.constant 0 : index
    %8 = vector.load %arg10[%c0_6, %c0_7] : memref<8x128xf32, #tpu.memory_space<vmem>>, vector<8x128xf32>
    tpu.vector_store %arg10[%c0_6, %c0_7], %7 {strides = array<i32>} : memref<8x128xf32, #tpu.memory_space<vmem>>, vector<8x128xf32>,
    %c0_8 = arith.constant 0 : index
    %c0_9 = arith.constant 0 : index
    %9 = vector.load %arg11[%c0_8, %c0_9] : memref<8x128xf32, #tpu.memory_space<vmem>>, vector<8x128xf32>
    %c0_10 = arith.constant 0 : index
    %c0_11 = arith.constant 0 : index
    %10 = vector.load %arg6[%c0_10, %c0_11] : memref<1x128xf32, #tpu.memory_space<vmem>>, vector<1x128xf32>
    %11 = vector.broadcast %10 : vector<1x128xf32> to vector<8x128xf32>
    %12 = arith.mulf %3, %11 : vector<8x128xf32>
    %c0_12 = arith.constant 0 : index
    %c0_13 = arith.constant 0 : index
    %13 = vector.load %arg5[%c0_12, %c0_13] : memref<128x128xf32, #tpu.memory_space<vmem>>, vector<128x128xf32>
    %cst_14 = arith.constant dense<0.000000e+00> : vector<8x128xf32>
    %14 = tpu.matmul %12, %13, %cst_14 {dimension_numbers = #tpu.dot_dimension_numbers<[1], [1], [0], [0], [0, 0, 1, 0], [], []>} : vector<8x128xf32>, vector<128x128xf32>, vector<8x128xf32> -> vector<8x128xf32>
    %15 = arith.addf %9, %14 : vector<8x128xf32>
    %c0_15 = arith.constant 0 : index
    %c0_16 = arith.constant 0 : index
    %16 = vector.load %arg11[%c0_15, %c0_16] : memref<8x128xf32, #tpu.memory_space<vmem>>, vector<8x128xf32>
    tpu.vector_store %arg11[%c0_15, %c0_16], %15 {strides = array<i32>} : memref<8x128xf32, #tpu.memory_space<vmem>>, vector<8x128xf32>,
    %c1_i32 = arith.constant 1 : i32
    %17 = arith.cmpi eq, %arg2, %c1_i32 : i32
    %18 = arith.extui %17 : i1 to i32
    %c0_i32_17 = arith.constant 0 : i32
    %19 = arith.cmpi ne, %18, %c0_i32_17 : i32
    scf.if %19 {
      %c0_18 = arith.constant 0 : index
      %c0_19 = arith.constant 0 : index
      %20 = vector.load %arg10[%c0_18, %c0_19] : memref<8x128xf32, #tpu.memory_space<vmem>>, vector<8x128xf32>
      %c0_20 = arith.constant 0 : index
      %c0_21 = arith.constant 0 : index
      %21 = vector.load %arg11[%c0_20, %c0_21] : memref<8x128xf32, #tpu.memory_space<vmem>>, vector<8x128xf32>
      %c0_22 = arith.constant 0 : index
      %c0_23 = arith.constant 0 : index
      %22 = vector.load %arg7[%c0_22, %c0_23] : memref<1x128xf32, #tpu.memory_space<vmem>>, vector<1x128xf32>
      %23 = vector.broadcast %22 : vector<1x128xf32> to vector<8x128xf32>
      %24 = arith.mulf %21, %23 : vector<8x128xf32>
      %25 = arith.addf %20, %24 : vector<8x128xf32>
      %c0_24 = arith.constant 0 : index
      %c0_25 = arith.constant 0 : index
      %26 = vector.load %arg8[%c0_24, %c0_25] : memref<1x128xf32, #tpu.memory_space<vmem>>, vector<1x128xf32>
      %27 = vector.broadcast %26 : vector<1x128xf32> to vector<8x128xf32>
      %28 = arith.addf %25, %27 : vector<8x128xf32>
      %c0_26 = arith.constant 0 : index
      %c0_27 = arith.constant 0 : index
      %29 = vector.load %arg9[%c0_26, %c0_27] : memref<8x128xf32, #tpu.memory_space<vmem>>, vector<8x128xf32>
      tpu.vector_store %arg9[%c0_26, %c0_27], %28 {strides = array<i32>} : memref<8x128xf32, #tpu.memory_space<vmem>>, vector<8x128xf32>,
    } else {
    }
    return
  }
  func.func @transform_0(%arg0: i32, %arg1: i32, %arg2: i32) -> (i32, i32) {
    %c0_i32 = arith.constant 0 : i32
    return %arg0, %arg2 : i32, i32
  }
  func.func @transform_1(%arg0: i32, %arg1: i32, %arg2: i32) -> (i32, i32) {
    %c0_i32 = arith.constant 0 : i32
    return %arg1, %arg2 : i32, i32
  }
  func.func @transform_2(%arg0: i32, %arg1: i32, %arg2: i32) -> (i32, i32) {
    %c0_i32 = arith.constant 0 : i32
    return %arg1, %arg2 : i32, i32
  }
  func.func @transform_3(%arg0: i32, %arg1: i32, %arg2: i32) -> (i32, i32) {
    %c0_i32 = arith.constant 0 : i32
    %c0_i32_0 = arith.constant 0 : i32
    return %c0_i32, %arg2 : i32, i32
  }
  func.func @transform_4(%arg0: i32, %arg1: i32, %arg2: i32) -> (i32, i32) {
    %c0_i32 = arith.constant 0 : i32
    %c0_i32_0 = arith.constant 0 : i32
    return %c0_i32, %arg1 : i32, i32
  }
  func.func @transform_5(%arg0: i32, %arg1: i32, %arg2: i32) -> (i32, i32) {
    %c0_i32 = arith.constant 0 : i32
    %c0_i32_0 = arith.constant 0 : i32
    return %c0_i32, %arg1 : i32, i32
  }
  func.func @transform_6(%arg0: i32, %arg1: i32, %arg2: i32) -> (i32, i32) {
    %c0_i32 = arith.constant 0 : i32
    return %arg0, %arg1 : i32, i32
  }
}

</mosaic_0001>

<llo_original>
// kernel: noisy_linear.1
$region0: #{noisy_linear.1}
  #allocation0 [shape = 'u32[]', space=smem, size = 0x4, offset = 0x4, fixed_abs, tag = 'smem constant byte address 0x4 - core index']
  #allocation1 [shape = 'u32[144,128]{1,0:T(1,128)}', space=vmem, size = 0x12000, scoped, tag = 'internal scratch']
  #allocation2 [shape = 'f32[8,128]{1,0:T(8,128)}', space=vmem, size = 0x1000, scoped, tag = 'scratch operand']
  #allocation3 [shape = 'f32[8,128]{1,0:T(8,128)}', space=vmem, size = 0x1000, scoped, tag = 'scratch operand']
  %s0 = inlined_call_operand.vmem [shape: f32[8,256], index: 0, kind: input, shape index: {}]
  %s1 = inlined_call_operand.hbm [shape: f32[384,256], index: 1, kind: input, shape index: {}]
  %s2 = inlined_call_operand.hbm [shape: f32[384,256], index: 2, kind: input, shape index: {}]
  %s3 = inlined_call_operand.vmem [shape: f32[1,256], index: 3, kind: input, shape index: {}]
  %s4 = inlined_call_operand.vmem [shape: f32[1,384], index: 4, kind: input, shape index: {}]
  %s5 = inlined_call_operand.vmem [shape: f32[1,384], index: 5, kind: input, shape index: {}]
  %s6 = inlined_call_operand.hbm [shape: f32[8,384], index: 6, kind: output, shape index: {}]
  %s7 = sld [smem:[#allocation0]]
  $region73: #{noisy_linear.1} parent=0
    _
  %s9 = ssub.s32 1, %s7
  %s10 = scalar_select 0, %s9, %s7
  $region1: #{noisy_linear.1} parent=0
    #allocation4 [shape = 'u8[131072]{0}', space=vmem, size = 0x20000, scoped, tag = 'input window, operand 1']
    #allocation5 [shape = 's32[2]{0}', space=sflag, size = 0x8, scoped, tag = 'scoped memory for noisy_linear.1']
    #allocation6 [shape = 's32[2]{0}', space=sflag, size = 0x8, scoped, tag = 'scoped memory for noisy_linear.1']
    #allocation7 [shape = 'u8[131072]{0}', space=vmem, size = 0x20000, scoped, tag = 'input window, operand 2']
    #allocation8 [shape = 's32[2]{0}', space=sflag, size = 0x8, scoped, tag = 'scoped memory for noisy_linear.1']
    #allocation9 [shape = 'u8[8192]{0}', space=vmem, size = 0x2000, scoped, tag = 'output window, operand 0']
    %11 = vsyncpa [#allocation5], 0
    %s12 = scalar_lea.sflag [#allocation5], 1
    %13 = vsyncpa %s12, 0
    %14 = vsyncpa [#allocation8], 0
    %s15 = scalar_lea.sflag [#allocation8], 1
    %16 = vsyncpa %s15, 0
    %17 = vsyncpa [#allocation6], 0
    %s18 = scalar_lea.sflag [#allocation6], 1
    %19 = vsyncpa %s18, 0
    loop: start=0, step=1, limit=8
    $region2: #{noisy_linear.1} parent=1 // loop_pre_header
      _
    $region3: #{noisy_linear.1} parent=1 // loop_header
      %s21 = sphi 0, %s25
      %p22 = scmp.ge.s32.totalorder %s21, 8
      %s28 = sphi 0, %s47
      %s29 = sphi 0, %s43
      %s30 = sphi 0, %s39
      %s31 = sphi 0, %s28
      %s32 = sphi 0, %s29
      %s33 = sphi 0, %s30
      %s34 = sphi 0, %s31
      %s35 = sphi 0, %s32
      %s36 = sphi 0, %s33
      %s52 = sphi 0, %s54
      %s55 = sphi 0, %s52
      %s56 = sphi 0, %s55
      %s72 = sphi 0, %s56
      %s80 = sphi 0, %s82
      %s83 = sphi 0, %s80
      %s84 = sphi 0, %s83
      %s100 = sphi 0, %s84
      %s108 = sphi 0, %s110
      %s111 = sphi 0, %s108
      %s112 = sphi 0, %s111
      %s128 = sphi 0, %s112
      %s134 = sphi 0, %s136
      %s137 = sphi 0, %s134
      %s138 = sphi 0, %s137
      %s154 = sphi 0, %s138
      %s160 = sphi 0, %s162
      %s163 = sphi 0, %s160
      %s164 = sphi 0, %s163
      %s180 = sphi 0, %s164
      %s186 = sphi 0, %s188
      %s189 = sphi 0, %s186
      %s190 = sphi 0, %s189
      %s206 = sphi 0, %s190
      %s214 = sphi 0, %s216
      %s217 = sphi 0, %s214
      %s218 = sphi 0, %s217
      %s234 = sphi 0, %s218
    $region4: #{noisy_linear.1} parent=1 // loop_header_branch
      %24 = sbr.rel (%p22) target = $region8
    $region5: #{noisy_linear.1} parent=1 // loop_body
      %s26 = ssub.s32 %s21, 1
      %s27 = ssub.s32 %s21, 2
      %s37 = sadd.s32 1, %s30
      %p38 = scmp.ge.s32.totalorder %s37, 2
      %s39 = scalar_select %p38, 0, %s37
      %s40 = sadd.s32 1, %s29
      %s41 = scalar_select %p38, %s40, %s29
      %p42 = scmp.ge.s32.totalorder %s41, 3
      %s43 = scalar_select %p42, 0, %s41
      %s44 = sadd.s32 1, %s28
      %s45 = scalar_select %p42, %s44, %s28
      %p46 = scmp.ge.s32.totalorder %s45, 1
      %s47 = scalar_select %p46, 0, %s45
      %s48 = ssub.s32 %s28, %s47
      %s49 = ssub.s32 %s30, %s39
      %s50 = sor.u32 %s48, %s49
      %p51 = scmp.eq.s32.totalorder %s50, 0
      %s53 = sadd.s32 %s52, 1
      %s54 = scalar_select %p51, %s52, %s53
      %p57 = pneg %p51
      %p58 = scmp.eq.s32.totalorder %s21, 5
      %p59 = por %p57, %p58
      %p60 = scmp.ne.s32.totalorder %s52, %s55
      %p61 = scmp.eq.s32.totalorder %s21, 0
      %p62 = por %p60, %p61
      %p63 = scmp.ne.s32.totalorder %s52, %s55
      %p64 = scmp.eq.s32.totalorder %s26, 5
      %p65 = por %p63, %p64
      %p66 = scmp.ne.s32.totalorder %s55, %s56
      %p67 = scmp.eq.s32.totalorder %s26, 0
      %p68 = por %p66, %p67
      %p69 = scmp.ne.s32.totalorder %s55, %s56
      %p70 = scmp.eq.s32.totalorder %s27, 5
      %p71 = por %p69, %p70
      %p73 = scmp.ne.s32.totalorder %s56, %s72
      %p74 = scmp.eq.s32.totalorder %s27, 0
      %p75 = por %p73, %p74
      %s76 = ssub.s32 %s29, %s43
      %s77 = ssub.s32 %s30, %s39
      %s78 = sor.u32 %s76, %s77
      %p79 = scmp.eq.s32.totalorder %s78, 0
      %s81 = sadd.s32 %s80, 1
      %s82 = scalar_select %p79, %s80, %s81
      %p85 = pneg %p79
      %p86 = scmp.eq.s32.totalorder %s21, 5
      %p87 = por %p85, %p86
      %p88 = scmp.ne.s32.totalorder %s80, %s83
      %p89 = scmp.eq.s32.totalorder %s21, 0
      %p90 = por %p88, %p89
      %p91 = scmp.ne.s32.totalorder %s80, %s83
      %p92 = scmp.eq.s32.totalorder %s26, 5
      %p93 = por %p91, %p92
      %p94 = scmp.ne.s32.totalorder %s83, %s84
      %p95 = scmp.eq.s32.totalorder %s26, 0
      %p96 = por %p94, %p95
      %p97 = scmp.ne.s32.totalorder %s83, %s84
      %p98 = scmp.eq.s32.totalorder %s27, 5
      %p99 = por %p97, %p98
      %p101 = scmp.ne.s32.totalorder %s84, %s100
      %p102 = scmp.eq.s32.totalorder %s27, 0
      %p103 = por %p101, %p102
      %s104 = ssub.s32 %s29, %s43
      %s105 = ssub.s32 %s30, %s39
      %s106 = sor.u32 %s104, %s105
      %p107 = scmp.eq.s32.totalorder %s106, 0
      %s109 = sadd.s32 %s108, 1
      %s110 = scalar_select %p107, %s108, %s109
      %p113 = pneg %p107
      %p114 = scmp.eq.s32.totalorder %s21, 5
      %p115 = por %p113, %p114
      %p116 = scmp.ne.s32.totalorder %s108, %s111
      %p117 = scmp.eq.s32.totalorder %s21, 0
      %p118 = por %p116, %p117
      %p119 = scmp.ne.s32.totalorder %s108, %s111
      %p120 = scmp.eq.s32.totalorder %s26, 5
      %p121 = por %p119, %p120
      %p122 = scmp.ne.s32.totalorder %s111, %s112
      %p123 = scmp.eq.s32.totalorder %s26, 0
      %p124 = por %p122, %p123
      %p125 = scmp.ne.s32.totalorder %s111, %s112
      %p126 = scmp.eq.s32.totalorder %s27, 5
      %p127 = por %p125, %p126
      %p129 = scmp.ne.s32.totalorder %s112, %s128
      %p130 = scmp.eq.s32.totalorder %s27, 0
      %p131 = por %p129, %p130
      %s132 = ssub.s32 %s30, %s39
      %p133 = scmp.eq.s32.totalorder %s132, 0
      %s135 = sadd.s32 %s134, 1
      %s136 = scalar_select %p133, %s134, %s135
      %p139 = pneg %p133
      %p140 = scmp.eq.s32.totalorder %s21, 5
      %p141 = por %p139, %p140
      %p142 = scmp.ne.s32.totalorder %s134, %s137
      %p143 = scmp.eq.s32.totalorder %s21, 0
      %p144 = por %p142, %p143
      %p145 = scmp.ne.s32.totalorder %s134, %s137
      %p146 = scmp.eq.s32.totalorder %s26, 5
      %p147 = por %p145, %p146
      %p148 = scmp.ne.s32.totalorder %s137, %s138
      %p149 = scmp.eq.s32.totalorder %s26, 0
      %p150 = por %p148, %p149
      %p151 = scmp.ne.s32.totalorder %s137, %s138
      %p152 = scmp.eq.s32.totalorder %s27, 5
      %p153 = por %p151, %p152
      %p155 = scmp.ne.s32.totalorder %s138, %s154
      %p156 = scmp.eq.s32.totalorder %s27, 0
      %p157 = por %p155, %p156
      %s158 = ssub.s32 %s29, %s43
      %p159 = scmp.eq.s32.totalorder %s158, 0
      %s161 = sadd.s32 %s160, 1
      %s162 = scalar_select %p159, %s160, %s161
      %p165 = pneg %p159
      %p166 = scmp.eq.s32.totalorder %s21, 5
      %p167 = por %p165, %p166
      %p168 = scmp.ne.s32.totalorder %s160, %s163
      %p169 = scmp.eq.s32.totalorder %s21, 0
      %p170 = por %p168, %p169
      %p171 = scmp.ne.s32.totalorder %s160, %s163
      %p172 = scmp.eq.s32.totalorder %s26, 5
      %p173 = por %p171, %p172
      %p174 = scmp.ne.s32.totalorder %s163, %s164
      %p175 = scmp.eq.s32.totalorder %s26, 0
      %p176 = por %p174, %p175
      %p177 = scmp.ne.s32.totalorder %s163, %s164
      %p178 = scmp.eq.s32.totalorder %s27, 5
      %p179 = por %p177, %p178
      %p181 = scmp.ne.s32.totalorder %s164, %s180
      %p182 = scmp.eq.s32.totalorder %s27, 0
      %p183 = por %p181, %p182
      %s184 = ssub.s32 %s29, %s43
      %p185 = scmp.eq.s32.totalorder %s184, 0
      %s187 = sadd.s32 %s186, 1
      %s188 = scalar_select %p185, %s186, %s187
      %p191 = pneg %p185
      %p192 = scmp.eq.s32.totalorder %s21, 5
      %p193 = por %p191, %p192
      %p194 = scmp.ne.s32.totalorder %s186, %s189
      %p195 = scmp.eq.s32.totalorder %s21, 0
      %p196 = por %p194, %p195
      %p197 = scmp.ne.s32.totalorder %s186, %s189
      %p198 = scmp.eq.s32.totalorder %s26, 5
      %p199 = por %p197, %p198
      %p200 = scmp.ne.s32.totalorder %s189, %s190
      %p201 = scmp.eq.s32.totalorder %s26, 0
      %p202 = por %p200, %p201
      %p203 = scmp.ne.s32.totalorder %s189, %s190
      %p204 = scmp.eq.s32.totalorder %s27, 5
      %p205 = por %p203, %p204
      %p207 = scmp.ne.s32.totalorder %s190, %s206
      %p208 = scmp.eq.s32.totalorder %s27, 0
      %p209 = por %p207, %p208
      %s210 = ssub.s32 %s28, %s47
      %s211 = ssub.s32 %s29, %s43
      %s212 = sor.u32 %s210, %s211
      %p213 = scmp.eq.s32.totalorder %s212, 0
      %s215 = sadd.s32 %s214, 1
      %s216 = scalar_select %p213, %s214, %s215
      %p219 = pneg %p213
      %p220 = scmp.eq.s32.totalorder %s21, 5
      %p221 = por %p219, %p220
      %p222 = scmp.ne.s32.totalorder %s214, %s217
      %p223 = scmp.eq.s32.totalorder %s21, 0
      %p224 = por %p222, %p223
      %p225 = scmp.ne.s32.totalorder %s214, %s217
      %p226 = scmp.eq.s32.totalorder %s26, 5
      %p227 = por %p225, %p226
      %p228 = scmp.ne.s32.totalorder %s217, %s218
      %p229 = scmp.eq.s32.totalorder %s26, 0
      %p230 = por %p228, %p229
      %p231 = scmp.ne.s32.totalorder %s217, %s218
      %p232 = scmp.eq.s32.totalorder %s27, 5
      %p233 = por %p231, %p232
      %p235 = scmp.ne.s32.totalorder %s218, %s234
      %p236 = scmp.eq.s32.totalorder %s27, 0
      %p237 = por %p235, %p236
      %p238 = scmp.le.s32.totalorder 1, %s21
      %p239 = scmp.lt.s32.totalorder %s21, 7
      %p240 = pnand %p238, %p239
      %p241 = pneg %p240
      // Predicated region
      $region9: #{noisy_linear.1} parent=5 // pred_check
        _
      $region10: #{noisy_linear.1} parent=5 // pred_check_branch
        %243 = sbr.rel (%p240) target = $region12
      $region11: #{noisy_linear.1} parent=5 // pred_region
        %s244 = ssub.s32 %s21, 1
      $region12: #{noisy_linear.1} parent=5 // pred_fallthru
        _
      %p245 = scmp.lt.s32.totalorder %s21, 6
      // Predicated region
      $region13: #{noisy_linear.1} parent=5 // pred_check
        %p246 = pneg %p245
      $region14: #{noisy_linear.1} parent=5 // pred_check_branch
        %248 = sbr.rel (%p246) target = $region16
      $region15: #{noisy_linear.1} parent=5 // pred_region
        // Predicated region
        $region17: #{noisy_linear.1} parent=15 // pred_check
          %p249 = pneg %p62
        $region18: #{noisy_linear.1} parent=15 // pred_check_branch
          %251 = sbr.rel (%p249) target = $region20
        $region19: #{noisy_linear.1} parent=15 // pred_region
          %p252 = scmp.lt.s32.totalorder %s28, 0
          %s253 = scalar_select %p252, %s28, 0
          %p254 = scmp.lt.s32.totalorder %s30, 1
          %s255 = scalar_select %p254, %s30, 1
          %s256 = smul.addr %s253, 2
          %s257 = sadd.s32 %s255, %s256
          %s258 = smul.addr %s257, 8
          %s259 = scalar_lea.vmem %s0, %s258
        $region20: #{noisy_linear.1} parent=15 // pred_fallthru
          _
        // Predicated region
        $region21: #{noisy_linear.1} parent=15 // pred_check
          %p260 = pneg %p90
        $region22: #{noisy_linear.1} parent=15 // pred_check_branch
          %262 = sbr.rel (%p260) target = $region24
        $region23: #{noisy_linear.1} parent=15 // pred_region
          %s263 = sand.u32 %s80, 1
          %s264 = scalar_lea.sflag [#allocation5], %s263
          %s265 = sand.u32 %s80, 1
          %s266 = smul.addr %s265, 128
          %s267 = scalar_lea.vmem [#allocation4], %s266
          %s268 = smul.u32 16, %s29
          %s270 = ssub.s32 2048, 2048
          %271 = vsyncadd %s264, %s270
          %s272 = smul.addr %s268, 2
          %s273 = sadd.s32 %s30, %s272
          %s274 = smul.addr %s273, 128
          %s275 = scalar_lea.hbm %s1, %s274
          %s276 = sshll.u32 %s267, 4
          %s277 = int_to_ptr.vmem [resolvable:$true] %s276
          %282 = dma.hbm_to_vmem [thread:$0]  %s275, 2048, %s277, %s264, 256, 128, 8
        $region24: #{noisy_linear.1} parent=15 // pred_fallthru
          _
        // Predicated region
        $region25: #{noisy_linear.1} parent=15 // pred_check
          %p283 = pneg %p118
        $region26: #{noisy_linear.1} parent=15 // pred_check_branch
          %285 = sbr.rel (%p283) target = $region28
        $region27: #{noisy_linear.1} parent=15 // pred_region
          %s286 = sand.u32 %s108, 1
          %s287 = scalar_lea.sflag [#allocation8], %s286
          %s288 = sand.u32 %s108, 1
          %s289 = smul.addr %s288, 128
          %s290 = scalar_lea.vmem [#allocation7], %s289
          %s291 = smul.u32 16, %s29
          %s293 = ssub.s32 2048, 2048
          %294 = vsyncadd %s287, %s293
          %s295 = smul.addr %s291, 2
          %s296 = sadd.s32 %s30, %s295
          %s297 = smul.addr %s296, 128
          %s298 = scalar_lea.hbm %s2, %s297
          %s299 = sshll.u32 %s290, 4
          %s300 = int_to_ptr.vmem [resolvable:$true] %s299
          %305 = dma.hbm_to_vmem [thread:$0]  %s298, 2048, %s300, %s287, 256, 128, 8
        $region28: #{noisy_linear.1} parent=15 // pred_fallthru
          _
        // Predicated region
        $region29: #{noisy_linear.1} parent=15 // pred_check
          %p306 = pneg %p144
        $region30: #{noisy_linear.1} parent=15 // pred_check_branch
          %308 = sbr.rel (%p306) target = $region32
        $region31: #{noisy_linear.1} parent=15 // pred_region
          %p309 = scmp.lt.s32.totalorder %s30, 1
          %s310 = scalar_select %p309, %s30, 1
          %s311 = scalar_lea.vmem %s3, %s310
        $region32: #{noisy_linear.1} parent=15 // pred_fallthru
          _
        // Predicated region
        $region33: #{noisy_linear.1} parent=15 // pred_check
          %p312 = pneg %p170
        $region34: #{noisy_linear.1} parent=15 // pred_check_branch
          %314 = sbr.rel (%p312) target = $region36
        $region35: #{noisy_linear.1} parent=15 // pred_region
          %p315 = scmp.lt.s32.totalorder %s29, 2
          %s316 = scalar_select %p315, %s29, 2
          %s317 = scalar_lea.vmem %s4, %s316
        $region36: #{noisy_linear.1} parent=15 // pred_fallthru
          _
        // Predicated region
        $region37: #{noisy_linear.1} parent=15 // pred_check
          %p318 = pneg %p196
        $region38: #{noisy_linear.1} parent=15 // pred_check_branch
          %320 = sbr.rel (%p318) target = $region40
        $region39: #{noisy_linear.1} parent=15 // pred_region
          %p321 = scmp.lt.s32.totalorder %s29, 2
          %s322 = scalar_select %p321, %s29, 2
          %s323 = scalar_lea.vmem %s5, %s322
        $region40: #{noisy_linear.1} parent=15 // pred_fallthru
          _
      $region16: #{noisy_linear.1} parent=5 // pred_fallthru
        _
      %p324 = scmp.le.s32.totalorder 1, %s21
      %p325 = scmp.lt.s32.totalorder %s21, 7
      %p326 = pnand %p324, %p325
      %p327 = pneg %p326
      // Predicated region
      $region41: #{noisy_linear.1} parent=5 // pred_check
        _
      $region42: #{noisy_linear.1} parent=5 // pred_check_branch
        %329 = sbr.rel (%p326) target = $region44
      $region43: #{noisy_linear.1} parent=5 // pred_region
        %s330 = ssub.s32 %s21, 1
        %s331 = sand.u32 %s83, 1
        %s332 = scalar_lea.sflag [#allocation5], %s331
        %s333 = sand.u32 %s83, 1
        %s334 = smul.addr %s333, 128
        %s335 = scalar_lea.vmem [#allocation4], %s334
        // Predicated region
        $region45: #{noisy_linear.1} parent=43 // pred_check
          %p336 = pneg %p96
        $region46: #{noisy_linear.1} parent=43 // pred_check_branch
          %338 = sbr.rel (%p336) target = $region48
        $region47: #{noisy_linear.1} parent=43 // pred_region
          %339 = dma.done %s332, 2048
        $region48: #{noisy_linear.1} parent=43 // pred_fallthru
          _
        %s340 = sand.u32 %s111, 1
        %s341 = scalar_lea.sflag [#allocation8], %s340
        %s342 = sand.u32 %s111, 1
        %s343 = smul.addr %s342, 128
        %s344 = scalar_lea.vmem [#allocation7], %s343
        // Predicated region
        $region49: #{noisy_linear.1} parent=43 // pred_check
          %p345 = pneg %p124
        $region50: #{noisy_linear.1} parent=43 // pred_check_branch
          %347 = sbr.rel (%p345) target = $region52
        $region51: #{noisy_linear.1} parent=43 // pred_region
          %348 = dma.done %s341, 2048
        $region52: #{noisy_linear.1} parent=43 // pred_fallthru
          _
        %p349 = scmp.lt.s32.totalorder %s31, 0
        %s350 = scalar_select %p349, %s31, 0
        %p351 = scmp.lt.s32.totalorder %s33, 1
        %s352 = scalar_select %p351, %s33, 1
        %s353 = smul.addr %s350, 2
        %s354 = sadd.s32 %s352, %s353
        %s355 = smul.addr %s354, 8
        %s356 = scalar_lea.vmem %s0, %s355
        %p357 = pneg %p68
        %p358 = pneg %p65
        %s359 = sand.u32 %s83, 1
        %s360 = scalar_lea.sflag [#allocation5], %s359
        %s361 = sand.u32 %s83, 1
        %s362 = smul.addr %s361, 128
        %s363 = scalar_lea.vmem [#allocation4], %s362
        %p364 = pneg %p96
        %p365 = pneg %p93
        %s366 = sand.u32 %s111, 1
        %s367 = scalar_lea.sflag [#allocation8], %s366
        %s368 = sand.u32 %s111, 1
        %s369 = smul.addr %s368, 128
        %s370 = scalar_lea.vmem [#allocation7], %s369
        %p371 = pneg %p124
        %p372 = pneg %p121
        %p373 = scmp.lt.s32.totalorder %s33, 1
        %s374 = scalar_select %p373, %s33, 1
        %s375 = scalar_lea.vmem %s3, %s374
        %p376 = pneg %p150
        %p377 = pneg %p147
        %p378 = scmp.lt.s32.totalorder %s32, 2
        %s379 = scalar_select %p378, %s32, 2
        %s380 = scalar_lea.vmem %s4, %s379
        %p381 = pneg %p176
        %p382 = pneg %p173
        %p383 = scmp.lt.s32.totalorder %s32, 2
        %s384 = scalar_select %p383, %s32, 2
        %s385 = scalar_lea.vmem %s5, %s384
        %p386 = pneg %p202
        %p387 = pneg %p199
        %p388 = pneg %p230
        %p389 = pneg %p227
        %s390 = sand.u32 %s217, 1
        %s391 = scalar_lea.sflag [#allocation6], %s390
        %s392 = sand.u32 %s217, 1
        %s393 = smul.addr %s392, 8
        %s394 = scalar_lea.vmem [#allocation9], %s393
        %p395 = scmp.lt.s32.totalorder %s31, 0
        %s396 = scalar_select %p395, %s31, 0
        %p397 = scmp.lt.s32.totalorder %s33, 1
        %s398 = scalar_select %p397, %s33, 1
        %s399 = smul.addr %s396, 2
        %s400 = sadd.s32 %s398, %s399
        %s401 = smul.addr %s400, 8
        %s402 = scalar_lea.vmem %s0, %s401
        %s403 = smul.u32 16, %s32
        %s404 = smul.u32 16, %s32
        %p405 = scmp.lt.s32.totalorder %s33, 1
        %s406 = scalar_select %p405, %s33, 1
        %s407 = scalar_lea.vmem %s3, %s406
        %p408 = scmp.lt.s32.totalorder %s32, 2
        %s409 = scalar_select %p408, %s32, 2
        %s410 = scalar_lea.vmem %s4, %s409
        %p411 = scmp.lt.s32.totalorder %s32, 2
        %s412 = scalar_select %p411, %s32, 2
        %s413 = scalar_lea.vmem %s5, %s412
        %p414 = scmp.eq.s32.totalorder %s33, 0
        // Predicated region
        $region53: #{noisy_linear.1} parent=43 // pred_check
          %p415 = pneg %p414
        $region54: #{noisy_linear.1} parent=43 // pred_check_branch
          %417 = sbr.rel (%p415) target = $region56
        $region55: #{noisy_linear.1} parent=43 // pred_region
          %418 = vst [vmem:[#allocation2] sm:$0xff] 0.0
          %419 = vst [vmem:[#allocation3] sm:$0xff] 0.0
        $region56: #{noisy_linear.1} parent=43 // pred_fallthru
          _
        %v420 = vld [vmem:[%s402] sm:$0xff]
        %v421 = vld [vmem:[#allocation2] sm:$0xff]
        %v422 = vld [vmem:[%s335] sm:$0xff]
        %v423 = vld [vmem:[%s335 + $0x8] sm:$0xff]
        %v424 = vld [vmem:[%s335 + $0x10] sm:$0xff]
        %v425 = vld [vmem:[%s335 + $0x18] sm:$0xff]
        %v426 = vld [vmem:[%s335 + $0x20] sm:$0xff]
        %v427 = vld [vmem:[%s335 + $0x28] sm:$0xff]
        %v428 = vld [vmem:[%s335 + $0x30] sm:$0xff]
        %v429 = vld [vmem:[%s335 + $0x38] sm:$0xff]
        %v430 = vld [vmem:[%s335 + $0x40] sm:$0xff]
        %v431 = vld [vmem:[%s335 + $0x48] sm:$0xff]
        %v432 = vld [vmem:[%s335 + $0x50] sm:$0xff]
        %v433 = vld [vmem:[%s335 + $0x58] sm:$0xff]
        %v434 = vld [vmem:[%s335 + $0x60] sm:$0xff]
        %v435 = vld [vmem:[%s335 + $0x68] sm:$0xff]
        %v436 = vld [vmem:[%s335 + $0x70] sm:$0xff]
        %v437 = vld [vmem:[%s335 + $0x78] sm:$0xff]
        %438 = vmatprep.subr.mxu0 0.0
        %439 = vmatpush1.xpose.msra.mxu0 %v437
        %440 = vmatprep.subr.mxu0 0.0
        %441 = vmatpush1.xpose.msra.mxu0 %v436
        %442 = vmatprep.subr.mxu0 0.0
        %443 = vmatpush1.xpose.msra.mxu0 %v435
        %444 = vmatprep.subr.mxu0 0.0
        %445 = vmatpush1.xpose.msra.mxu0 %v434
        %446 = vmatprep.subr.mxu0 0.0
        %447 = vmatpush1.xpose.msra.mxu0 %v433
        %448 = vmatprep.subr.mxu0 0.0
        %449 = vmatpush1.xpose.msra.mxu0 %v432
        %450 = vmatprep.subr.mxu0 0.0
        %451 = vmatpush1.xpose.msra.mxu0 %v431
        %452 = vmatprep.subr.mxu0 0.0
        %453 = vmatpush1.xpose.msra.mxu0 %v430
        %454 = vmatprep.subr.mxu0 0.0
        %455 = vmatpush1.xpose.msra.mxu0 %v429
        %456 = vmatprep.subr.mxu0 0.0
        %457 = vmatpush1.xpose.msra.mxu0 %v428
        %458 = vmatprep.subr.mxu0 0.0
        %459 = vmatpush1.xpose.msra.mxu0 %v427
        %460 = vmatprep.subr.mxu0 0.0
        %461 = vmatpush1.xpose.msra.mxu0 %v426
        %462 = vmatprep.subr.mxu0 0.0
        %463 = vmatpush1.xpose.msra.mxu0 %v425
        %464 = vmatprep.subr.mxu0 0.0
        %465 = vmatpush1.xpose.msra.mxu0 %v424
        %466 = vmatprep.subr.mxu0 0.0
        %467 = vmatpush1.xpose.msra.mxu0 %v423
        %468 = vmatprep.subr.mxu0 0.0
        %469 = vmatpush1.xpose.msra.mxu0 %v422
        %470 = vmatprep.subr.mxu0 0.0
        %471 = vmatpush2.xpose.msra.mxu0 0.0
        %472 = vmatprep.subr.mxu0 0.0
        %473 = vmatpush2.xpose.msra.mxu0 0.0
        %474 = vmatprep.subr.mxu0 0.0
        %475 = vmatpush2.xpose.msra.mxu0 0.0
        %476 = vmatprep.subr.mxu0 0.0
        %477 = vmatpush2.xpose.msra.mxu0 0.0
        %478 = vmatprep.subr.mxu0 0.0
        %479 = vmatpush2.xpose.msra.mxu0 0.0
        %480 = vmatprep.subr.mxu0 0.0
        %481 = vmatpush2.xpose.msra.mxu0 0.0
        %482 = vmatprep.subr.mxu0 0.0
        %483 = vmatpush2.xpose.msra.mxu0 0.0
        %484 = vmatprep.subr.mxu0 0.0
        %485 = vmatpush2.xpose.msra.mxu0 0.0
        %486 = vmatprep.subr.mxu0 0.0
        %487 = vmatpush2.xpose.msra.mxu0 0.0
        %488 = vmatprep.subr.mxu0 0.0
        %489 = vmatpush2.xpose.msra.mxu0 0.0
        %490 = vmatprep.subr.mxu0 0.0
        %491 = vmatpush2.xpose.msra.mxu0 0.0
        %492 = vmatprep.subr.mxu0 0.0
        %493 = vmatpush2.xpose.msra.mxu0 0.0
        %494 = vmatprep.subr.mxu0 0.0
        %495 = vmatpush2.xpose.msra.mxu0 0.0
        %496 = vmatprep.subr.mxu0 0.0
        %497 = vmatpush2.xpose.msra.mxu0 0.0
        %498 = vmatprep.subr.mxu0 0.0
        %499 = vmatpush2.xpose.msra.mxu0 0.0
        %500 = vmatprep.subr.mxu0 0.0
        %501 = vmatpush2.xpose.msra.mxu0 0.0
        %502 = vmatprep.mubr.f32.mxu0 0.0
        %503 = vmatmul.mubr.f32.gmra.mxu0 %v420
        %v504 = vpop.f32.mrf.mxu0
        %v505 = vadd.f32 0.0, %v504
        %v506 = vpop.f32.mrf.mxu0
        %507 = vdwg.mxu0
        %v508 = vadd.f32 %v421, %v505
        %509 = vst [vmem:[#allocation2] sm:$0xff] %v508
        %v510 = vld [vmem:[#allocation3] sm:$0xff]
        %v511 = vld [vmem:[%s407] sm:$0x1]
        %v513 = vlaneseq
        %v514 = vshrl.u32 %v513, 7
        %v515 = vsub.s32 0, %v514
        %v516 = vrot.slane %v511, %v515
        %v518 = vmul.f32 %v420, %v516
        %v519 = vld [vmem:[%s344] sm:$0xff]
        %v520 = vld [vmem:[%s344 + $0x8] sm:$0xff]
        %v521 = vld [vmem:[%s344 + $0x10] sm:$0xff]
        %v522 = vld [vmem:[%s344 + $0x18] sm:$0xff]
        %v523 = vld [vmem:[%s344 + $0x20] sm:$0xff]
        %v524 = vld [vmem:[%s344 + $0x28] sm:$0xff]
        %v525 = vld [vmem:[%s344 + $0x30] sm:$0xff]
        %v526 = vld [vmem:[%s344 + $0x38] sm:$0xff]
        %v527 = vld [vmem:[%s344 + $0x40] sm:$0xff]
        %v528 = vld [vmem:[%s344 + $0x48] sm:$0xff]
        %v529 = vld [vmem:[%s344 + $0x50] sm:$0xff]
        %v530 = vld [vmem:[%s344 + $0x58] sm:$0xff]
        %v531 = vld [vmem:[%s344 + $0x60] sm:$0xff]
        %v532 = vld [vmem:[%s344 + $0x68] sm:$0xff]
        %v533 = vld [vmem:[%s344 + $0x70] sm:$0xff]
        %v534 = vld [vmem:[%s344 + $0x78] sm:$0xff]
        %535 = vmatprep.subr.mxu0 0.0
        %536 = vmatpush1.xpose.msra.mxu0 %v534
        %537 = vmatprep.subr.mxu0 0.0
        %538 = vmatpush1.xpose.msra.mxu0 %v533
        %539 = vmatprep.subr.mxu0 0.0
        %540 = vmatpush1.xpose.msra.mxu0 %v532
        %541 = vmatprep.subr.mxu0 0.0
        %542 = vmatpush1.xpose.msra.mxu0 %v531
        %543 = vmatprep.subr.mxu0 0.0
        %544 = vmatpush1.xpose.msra.mxu0 %v530
        %545 = vmatprep.subr.mxu0 0.0
        %546 = vmatpush1.xpose.msra.mxu0 %v529
        %547 = vmatprep.subr.mxu0 0.0
        %548 = vmatpush1.xpose.msra.mxu0 %v528
        %549 = vmatprep.subr.mxu0 0.0
        %550 = vmatpush1.xpose.msra.mxu0 %v527
        %551 = vmatprep.subr.mxu0 0.0
        %552 = vmatpush1.xpose.msra.mxu0 %v526
        %553 = vmatprep.subr.mxu0 0.0
        %554 = vmatpush1.xpose.msra.mxu0 %v525
        %555 = vmatprep.subr.mxu0 0.0
        %556 = vmatpush1.xpose.msra.mxu0 %v524
        %557 = vmatprep.subr.mxu0 0.0
        %558 = vmatpush1.xpose.msra.mxu0 %v523
        %559 = vmatprep.subr.mxu0 0.0
        %560 = vmatpush1.xpose.msra.mxu0 %v522
        %561 = vmatprep.subr.mxu0 0.0
        %562 = vmatpush1.xpose.msra.mxu0 %v521
        %563 = vmatprep.subr.mxu0 0.0
        %564 = vmatpush1.xpose.msra.mxu0 %v520
        %565 = vmatprep.subr.mxu0 0.0
        %566 = vmatpush1.xpose.msra.mxu0 %v519
        %567 = vmatprep.subr.mxu0 0.0
        %568 = vmatpush2.xpose.msra.mxu0 0.0
        %569 = vmatprep.subr.mxu0 0.0
        %570 = vmatpush2.xpose.msra.mxu0 0.0
        %571 = vmatprep.subr.mxu0 0.0
        %572 = vmatpush2.xpose.msra.mxu0 0.0
        %573 = vmatprep.subr.mxu0 0.0
        %574 = vmatpush2.xpose.msra.mxu0 0.0
        %575 = vmatprep.subr.mxu0 0.0
        %576 = vmatpush2.xpose.msra.mxu0 0.0
        %577 = vmatprep.subr.mxu0 0.0
        %578 = vmatpush2.xpose.msra.mxu0 0.0
        %579 = vmatprep.subr.mxu0 0.0
        %580 = vmatpush2.xpose.msra.mxu0 0.0
        %581 = vmatprep.subr.mxu0 0.0
        %582 = vmatpush2.xpose.msra.mxu0 0.0
        %583 = vmatprep.subr.mxu0 0.0
        %584 = vmatpush2.xpose.msra.mxu0 0.0
        %585 = vmatprep.subr.mxu0 0.0
        %586 = vmatpush2.xpose.msra.mxu0 0.0
        %587 = vmatprep.subr.mxu0 0.0
        %588 = vmatpush2.xpose.msra.mxu0 0.0
        %589 = vmatprep.subr.mxu0 0.0
        %590 = vmatpush2.xpose.msra.mxu0 0.0
        %591 = vmatprep.subr.mxu0 0.0
        %592 = vmatpush2.xpose.msra.mxu0 0.0
        %593 = vmatprep.subr.mxu0 0.0
        %594 = vmatpush2.xpose.msra.mxu0 0.0
        %595 = vmatprep.subr.mxu0 0.0
        %596 = vmatpush2.xpose.msra.mxu0 0.0
        %597 = vmatprep.subr.mxu0 0.0
        %598 = vmatpush2.xpose.msra.mxu0 0.0
        %599 = vmatprep.mubr.f32.mxu0 0.0
        %600 = vmatmul.mubr.f32.gmra.mxu0 %v518
        %v601 = vpop.f32.mrf.mxu0
        %v602 = vadd.f32 0.0, %v601
        %v603 = vpop.f32.mrf.mxu0
        %604 = vdwg.mxu0
        %v605 = vadd.f32 %v510, %v602
        %606 = vst [vmem:[#allocation3] sm:$0xff] %v605
        %p607 = scmp.eq.s32.totalorder %s33, 1
        // Predicated region
        $region57: #{noisy_linear.1} parent=43 // pred_check
          %p608 = pneg %p607
        $region58: #{noisy_linear.1} parent=43 // pred_check_branch
          %610 = sbr.rel (%p608) target = $region60
        $region59: #{noisy_linear.1} parent=43 // pred_region
          %v611 = vld [vmem:[#allocation2] sm:$0xff]
          %v612 = vld [vmem:[#allocation3] sm:$0xff]
          %v613 = vld [vmem:[%s410] sm:$0x1]
          %v615 = vlaneseq
          %v616 = vshrl.u32 %v615, 7
          %v617 = vsub.s32 0, %v616
          %v618 = vrot.slane %v613, %v617
          %v620 = vmul.f32 %v612, %v618
          %v621 = vadd.f32 %v611, %v620
          %v622 = vld [vmem:[%s413] sm:$0x1]
          %v624 = vlaneseq
          %v625 = vshrl.u32 %v624, 7
          %v626 = vsub.s32 0, %v625
          %v627 = vrot.slane %v622, %v626
          %v629 = vadd.f32 %v621, %v627
          %630 = vst [vmem:[%s394] sm:$0xff] %v629
        $region60: #{noisy_linear.1} parent=43 // pred_fallthru
          _
        %s631 = sand.u32 %s217, 1
        %s632 = scalar_lea.sflag [#allocation6], %s631
        %s633 = sand.u32 %s217, 1
        %s634 = smul.addr %s633, 8
        %s635 = scalar_lea.vmem [#allocation9], %s634
        // Predicated region
        $region61: #{noisy_linear.1} parent=43 // pred_check
          %p636 = pneg %p227
        $region62: #{noisy_linear.1} parent=43 // pred_check_branch
          %638 = sbr.rel (%p636) target = $region64
        $region63: #{noisy_linear.1} parent=43 // pred_region
          %s640 = ssub.s32 128, 128
          %641 = vsyncadd %s632, %s640
          %s642 = smul.addr %s31, 3
          %s643 = sadd.s32 %s32, %s642
          %s644 = smul.addr %s643, 128
          %s645 = scalar_lea.hbm %s6, %s644
          %s647 = sshll.u32 %s635, 4
          %s648 = int_to_ptr.vmem [resolvable:$true] %s647
          %650 = dma.vmem_to_hbm [thread:$0]  %s648, 128, %s645, %s632
        $region64: #{noisy_linear.1} parent=43 // pred_fallthru
          _
      $region44: #{noisy_linear.1} parent=5 // pred_fallthru
        _
      %p651 = scmp.le.s32.totalorder 2, %s21
      // Predicated region
      $region65: #{noisy_linear.1} parent=5 // pred_check
        %p652 = pneg %p651
      $region66: #{noisy_linear.1} parent=5 // pred_check_branch
        %654 = sbr.rel (%p652) target = $region68
      $region67: #{noisy_linear.1} parent=5 // pred_region
        %s655 = ssub.s32 %s21, 2
        // Predicated region
        $region69: #{noisy_linear.1} parent=67 // pred_check
          %p656 = pneg %p233
        $region70: #{noisy_linear.1} parent=67 // pred_check_branch
          %658 = sbr.rel (%p656) target = $region72
        $region71: #{noisy_linear.1} parent=67 // pred_region
          %s659 = sand.u32 %s218, 1
          %s660 = scalar_lea.sflag [#allocation6], %s659
          %s661 = sand.u32 %s218, 1
          %s662 = smul.addr %s661, 8
          %s663 = scalar_lea.vmem [#allocation9], %s662
          %664 = dma.done %s660, 128
        $region72: #{noisy_linear.1} parent=67 // pred_fallthru
          _
      $region68: #{noisy_linear.1} parent=5 // pred_fallthru
        _
    $region6: #{noisy_linear.1} parent=1 // loop_footer
      %s25 = sadd.s32 1, %s21
    $region7: #{noisy_linear.1} parent=1 // loop_footer_branch
      %20 = sbr.rel target = $region3
    $region8: #{noisy_linear.1} parent=1 // loop_exit
      _
    %665 = vsyncpa [#allocation5], 1
    %s666 = scalar_lea.sflag [#allocation5], 1
    %667 = vsyncpa %s666, 1
    %668 = vsyncpa [#allocation8], 1
    %s669 = scalar_lea.sflag [#allocation8], 1
    %670 = vsyncpa %s669, 1
    %671 = vsyncpa [#allocation6], 1
    %s672 = scalar_lea.sflag [#allocation6], 1
    %673 = vsyncpa %s672, 1

</llo_original>
